<compile_context>
chip_gen: v5e
topology: v5e:2x2
jax: 0.10.0
libtpu: 0.0.40
codegen_flags: <defaults>
</compile_context>

<pallas_src>
import jax
import jax.numpy as jnp
from jax.experimental import pallas as pl
from jax.experimental.pallas import tpu as pltpu


def _downblock_kernel(x_ref, w1_ref, b1_ref, w2_ref, b2_ref, skip_ref, pool_ref):
    """One grid step processes TB independent (H, C) sequences.

    x_ref:    (TB, H, Cin)      activation dtype (f32 / bf16)
    w1_ref:   (3, Cin, Cout)    conv1 taps (BN1 folded), activation dtype
    b1_ref:   (1, Cout)         float32
    w2_ref:   (3, Cout, Cout)   conv2 taps (BN2 folded), activation dtype
    b2_ref:   (1, Cout)         float32
    skip_ref: (TB, H, Cout)
    pool_ref: (TB, H//2, Cout)
    """
    x = x_ref[...]                           # keep native dtype (bf16 feeds MXU directly)
    b1 = b1_ref[...].astype(jnp.float32)     # hoisted bias loads, (1, Cout)
    b2 = b2_ref[...].astype(jnp.float32)

    def conv_bn_relu(v, w_ref, b):
        # 1-D conv along H (kernel 3, zero pad 1) with folded BN, then bias + ReLU.
        # Three accumulating MXU matmuls (K = C each).  Shifted views are built on the
        # 3-D (TB, H, C) view so rows never leak across sequence boundaries.
        tb, hh, c = v.shape
        zrow = jnp.zeros((tb, 1, c), v.dtype)
        v_prev = jnp.concatenate([zrow, v[:, : hh - 1, :]], axis=1)   # x[h-1]
        v_next = jnp.concatenate([v[:, 1:, :], zrow], axis=1)         # x[h+1]
        m = tb * hh
        y = jnp.dot(v_prev.reshape(m, c), w_ref[0], preferred_element_type=jnp.float32)
        y = y + jnp.dot(v.reshape(m, c), w_ref[1], preferred_element_type=jnp.float32)
        y = y + jnp.dot(v_next.reshape(m, c), w_ref[2], preferred_element_type=jnp.float32)
        y = jnp.maximum(y + b, 0.0)                                   # (m, Cout), f32
        return y.reshape(tb, hh, -1)

    h1 = conv_bn_relu(x, w1_ref, b1).astype(x.dtype)    # (TB, H, Cout), MXU-friendly dtype
    h2 = conv_bn_relu(h1, w2_ref, b2)                   # (TB, H, Cout), f32

    skip_ref[...] = h2.astype(skip_ref.dtype)

    # MaxPool2d((2,1)): pairwise max over adjacent H rows.
    # TODO(synk): a fully in-register pool needs a value-level stride-2 slice or a
    # sublane-splitting reshape, neither of which lowers reliably in Mosaic; the stride-2
    # sublane readback of the freshly written VMEM block is the robust alternative.
    hh = h2.shape[1]
    even = skip_ref[:, pl.ds(0, hh // 2, stride=2), :]   # rows 0, 2, 4, ...
    odd = skip_ref[:, pl.ds(1, hh // 2, stride=2), :]    # rows 1, 3, 5, ...
    pool_ref[...] = jnp.maximum(even, odd)


def _choose_tb(B, H, Cin, Cout, itemsize, rows_target, vmem_budget_bytes):
    """Pick TB (sequences per grid step) so M = TB*H ~ rows_target without blowing VMEM."""
    # Per M-row bytes: double-buffered x/skip/pool IO blocks + f32 conv temporaries
    # (two shifted views, h1, h2 and the accumulator).
    io_bytes = 2 * itemsize * (Cin + Cout + (Cout + 1) // 2)
    tmp_bytes = 4 * (2 * Cin + 4 * Cout)
    rows_cap = max(H, vmem_budget_bytes // max(io_bytes + tmp_bytes, 1))
    rows = min(rows_target, rows_cap)
    return max(1, min(B, rows // max(H, 1)))


def downblock_bhc(x_bhc, w1, b1, w2, b2, *, rows_target=4096):
    """Core DownBlock in (B, H, C) layout.  Chain DownBlocks through this entry point so
    NCHW transposes only happen at model ingress/egress.  Returns (pool_bhc, skip_bhc)."""
    B, H, Cin = x_bhc.shape
    Cout = w1.shape[-1]
    assert H % 2 == 0, "H must be even for MaxPool2d((2,1)) without remainder"

    TB = _choose_tb(B, H, Cin, Cout, jnp.dtype(x_bhc.dtype).itemsize,
                    rows_target, vmem_budget_bytes=24 * 1024 * 1024)
    num_steps = pl.cdiv(B, TB)
    B_pad = num_steps * TB
    if B_pad != B:
        # Padded rows compute ReLU(bias) garbage that is sliced off below.
        x_bhc = jnp.pad(x_bhc, ((0, B_pad - B), (0, 0), (0, 0)))

    skip, pool = pl.pallas_call(
        _downblock_kernel,
        out_shape=(
            jax.ShapeDtypeStruct((B_pad, H, Cout), x_bhc.dtype),
            jax.ShapeDtypeStruct((B_pad, H // 2, Cout), x_bhc.dtype),
        ),
        grid_spec=pltpu.PrefetchScalarGridSpec(
            num_scalar_prefetch=0,
            grid=(num_steps,),
            in_specs=[
                pl.BlockSpec((TB, H, Cin), lambda i: (i, 0, 0)),
                pl.BlockSpec((3, Cin, Cout), lambda i: (0, 0, 0)),
                pl.BlockSpec((1, Cout), lambda i: (0, 0)),
                pl.BlockSpec((3, Cout, Cout), lambda i: (0, 0, 0)),
                pl.BlockSpec((1, Cout), lambda i: (0, 0)),
            ],
            out_specs=[
                pl.BlockSpec((TB, H, Cout), lambda i: (i, 0, 0)),
                pl.BlockSpec((TB, H // 2, Cout), lambda i: (i, 0, 0)),
            ],
        ),
        compiler_params=pltpu.CompilerParams(
            dimension_semantics=("parallel",),
            # Above the 16/32 MiB default scoped limits (v5e/v6e), below v7x's 64 MiB
            # physical; actual per-step usage is bounded by _choose_tb's 24 MiB budget.
            vmem_limit_bytes=48 * 1024 * 1024,
        ),
    )(x_bhc, w1, b1, w2, b2)

    if B_pad != B:
        skip = skip[:B]
        pool = pool[:B]
    return pool, skip


@jax.jit
def downblock_forward(x_nchw, w1, b1, w2, b2):
    """x_nchw: (N, Cin, H, W); w1: (3, Cin, Cout); w2: (3, Cout, Cout); b*: (Cout,).

    Returns (x_pooled, x_skip) in NCHW, matching DownBlock.forward.
    """
    N, Cin, H, W = x_nchw.shape
    Cout = w1.shape[-1]

    # NCHW -> (B, H, C) once at ingress (conv/pool only act along H).
    x_bhc = jnp.transpose(x_nchw, (0, 3, 2, 1)).reshape(N * W, H, Cin)

    act_dtype = x_nchw.dtype
    w1c = w1.astype(act_dtype)               # keep MXU operands in the activation dtype
    w2c = w2.astype(act_dtype)
    b1c = b1.astype(jnp.float32)[None, :]    # biases stay f32 (epilogue add is f32)
    b2c = b2.astype(jnp.float32)[None, :]

    pool_bhc, skip_bhc = downblock_bhc(x_bhc, w1c, b1c, w2c, b2c)

    x_skip = jnp.transpose(skip_bhc.reshape(N, W, H, Cout), (0, 3, 2, 1))
    x_pool = jnp.transpose(pool_bhc.reshape(N, W, H // 2, Cout), (0, 3, 2, 1))
    return x_pool, x_skip


def _fold_bn(w, b, gamma, beta, mean, var, eps=1e-5):
    """Fold eval-mode BatchNorm2d into conv weight/bias.

    w: (3, Cin, Cout), b/gamma/beta/mean/var: (Cout,)
    """
    scale = gamma / jnp.sqrt(var + eps)            # (Cout,)
    w_eff = w * scale[None, None, :]
    b_eff = (b - mean) * scale + beta
    return w_eff, b_eff


def _reference(x_nchw, w1, b1, w2, b2):
    """Pure-JAX reference (same math, no Pallas) for a correctness check."""
    N, Cin, H, W = x_nchw.shape
    Cout = w1.shape[-1]
    x = jnp.transpose(x_nchw, (0, 3, 2, 1)).reshape(N * W, H, Cin).astype(jnp.float32)

    def conv(v, w, b):
        zero = jnp.zeros_like(v[:, :1, :])
        vm = jnp.concatenate([zero, v[:, :-1, :]], axis=1)
        vp = jnp.concatenate([v[:, 1:, :], zero], axis=1)
        y = (jnp.einsum("bhc,cd->bhd", vm, w[0])
             + jnp.einsum("bhc,cd->bhd", v, w[1])
             + jnp.einsum("bhc,cd->bhd", vp, w[2]) + b)
        return jnp.maximum(y, 0.0)

    h2 = conv(conv(x, w1, b1), w2, b2)
    pool = jnp.maximum(h2[:, 0::2, :], h2[:, 1::2, :])
    skip = jnp.transpose(h2.reshape(N, W, H, Cout), (0, 3, 2, 1))
    pooled = jnp.transpose(pool.reshape(N, W, H // 2, Cout), (0, 3, 2, 1))
    return pooled.astype(x_nchw.dtype), skip.astype(x_nchw.dtype)


if __name__ == "__main__":
    # Small shapes: N=2, in_ch=4, H=16 (time axis), W=3 (IMU channel axis), out_ch=8.
    N, Cin, H, W = 2, 4, 16, 3
    Cout = 8
    K = 3

    key = jax.random.PRNGKey(0)
    keys = jax.random.split(key, 12)

    x = jax.random.normal(keys[0], (N, Cin, H, W), dtype=jnp.float32)

    # Conv1 / BN1 parameters
    w1_raw = jax.random.normal(keys[1], (K, Cin, Cout), jnp.float32) * 0.2
    b1_raw = jax.random.normal(keys[2], (Cout,), jnp.float32) * 0.1
    g1 = 1.0 + 0.1 * jax.random.normal(keys[3], (Cout,), jnp.float32)
    be1 = 0.1 * jax.random.normal(keys[4], (Cout,), jnp.float32)
    m1 = 0.05 * jax.random.normal(keys[5], (Cout,), jnp.float32)
    v1 = jnp.abs(1.0 + 0.1 * jax.random.normal(keys[6], (Cout,), jnp.float32))

    # Conv2 / BN2 parameters
    w2_raw = jax.random.normal(keys[7], (K, Cout, Cout), jnp.float32) * 0.2
    b2_raw = jax.random.normal(keys[8], (Cout,), jnp.float32) * 0.1
    g2 = 1.0 + 0.1 * jax.random.normal(keys[9], (Cout,), jnp.float32)
    be2 = 0.1 * jax.random.normal(keys[10], (Cout,), jnp.float32)
    m2 = 0.05 * jax.random.normal(keys[11], (Cout,), jnp.float32)
    v2 = jnp.abs(1.0 + 0.1 * jax.random.normal(keys[0], (Cout,), jnp.float32))

    # TODO(synk): training-mode BatchNorm (batch statistics / running-stat updates) not
    # implemented; eval-mode BN is folded into the conv weights/bias below.
    w1, b1 = _fold_bn(w1_raw, b1_raw, g1, be1, m1, v1)
    w2, b2 = _fold_bn(w2_raw, b2_raw, g2, be2, m2, v2)

    x_pool, x_skip = downblock_forward(x, w1, b1, w2, b2)
    jax.block_until_ready((x_pool, x_skip))

    ref_pool, ref_skip = _reference(x, w1, b1, w2, b2)
    assert x_skip.shape == (N, Cout, H, W), x_skip.shape
    assert x_pool.shape == (N, Cout, H // 2, W), x_pool.shape
    assert jnp.allclose(x_skip, ref_skip, atol=2e-5, rtol=2e-5)
    assert jnp.allclose(x_pool, ref_pool, atol=2e-5, rtol=2e-5)

    print("KERNEL_OK")
</pallas_src>

<mosaic_0001>
module attributes {stable_mosaic.version = 11 : i64} {
  func.func @_downblock_kernel(%arg0: i32, %arg1: memref<6x16x4xf32, #tpu.memory_space<vmem>>, %arg2: memref<3x4x8xf32, #tpu.memory_space<vmem>>, %arg3: memref<1x8xf32, #tpu.memory_space<vmem>>, %arg4: memref<3x8x8xf32, #tpu.memory_space<vmem>>, %arg5: memref<1x8xf32, #tpu.memory_space<vmem>>, %arg6: memref<6x16x8xf32, #tpu.memory_space<vmem>>, %arg7: memref<6x8x8xf32, #tpu.memory_space<vmem>>) attributes {dimension_semantics = [#tpu.dimension_semantics<parallel>], iteration_bounds = array<i64: 1>, scalar_prefetch = 0 : i64, scratch_operands = 0 : i64, tpu.core_type = #tpu.core_type<tc>, window_params = [{transform_indices = @transform_0, window_bounds = array<i64: 6, 16, 4>}, {pipeline_mode = #tpu.pipeline_mode<synchronous>, transform_indices = @transform_1, window_bounds = array<i64: 3, 4, 8>}, {pipeline_mode = #tpu.pipeline_mode<synchronous>, transform_indices = @transform_2, window_bounds = array<i64: 1, 8>}, {pipeline_mode = #tpu.pipeline_mode<synchronous>, transform_indices = @transform_3, window_bounds = array<i64: 3, 8, 8>}, {pipeline_mode = #tpu.pipeline_mode<synchronous>, transform_indices = @transform_4, window_bounds = array<i64: 1, 8>}, {transform_indices = @transform_5, window_bounds = array<i64: 6, 16, 8>}, {transform_indices = @transform_6, window_bounds = array<i64: 6, 8, 8>}]} {
    %c0 = arith.constant 0 : index
    %c0_0 = arith.constant 0 : index
    %c0_1 = arith.constant 0 : index
    %0 = vector.load %arg1[%c0, %c0_0, %c0_1] : memref<6x16x4xf32, #tpu.memory_space<vmem>>, vector<6x16x4xf32>
    %c0_2 = arith.constant 0 : index
    %c0_3 = arith.constant 0 : index
    %1 = vector.load %arg3[%c0_2, %c0_3] : memref<1x8xf32, #tpu.memory_space<vmem>>, vector<1x8xf32>
    %c0_4 = arith.constant 0 : index
    %c0_5 = arith.constant 0 : index
    %2 = vector.load %arg5[%c0_4, %c0_5] : memref<1x8xf32, #tpu.memory_space<vmem>>, vector<1x8xf32>
    %cst = arith.constant 0.000000e+00 : f32
    %3 = vector.broadcast %cst : f32 to vector<6x1x4xf32>
    %4 = vector.extract_strided_slice %0 {offsets = [0, 0, 0], sizes = [6, 15, 4], strides = [1, 1, 1]} : vector<6x16x4xf32> to vector<6x15x4xf32>
    %5 = tpu.concatenate %3, %4 in 1 : vector<6x1x4xf32>, vector<6x15x4xf32> -> vector<6x16x4xf32>
    %6 = vector.extract_strided_slice %0 {offsets = [0, 1, 0], sizes = [6, 15, 4], strides = [1, 1, 1]} : vector<6x16x4xf32> to vector<6x15x4xf32>
    %7 = tpu.concatenate %6, %3 in 1 : vector<6x15x4xf32>, vector<6x1x4xf32> -> vector<6x16x4xf32>
    %8 = vector.shape_cast %5 : vector<6x16x4xf32> to vector<96x4xf32>
    %c0_6 = arith.constant 0 : index
    %c0_7 = arith.constant 0 : index
    %c0_8 = arith.constant 0 : index
    %9 = vector.load %arg2[%c0_6, %c0_7, %c0_8] : memref<3x4x8xf32, #tpu.memory_space<vmem>>, vector<1x4x8xf32>
    %10 = vector.shape_cast %9 : vector<1x4x8xf32> to vector<4x8xf32>
    %cst_9 = arith.constant dense<0.000000e+00> : vector<96x8xf32>
    %11 = tpu.matmul %8, %10, %cst_9 {dimension_numbers = #tpu.dot_dimension_numbers<[1], [0], [0], [1], [0, 0, 1, 1], [], []>} : vector<96x4xf32>, vector<4x8xf32>, vector<96x8xf32> -> vector<96x8xf32>
    %12 = vector.shape_cast %0 : vector<6x16x4xf32> to vector<96x4xf32>
    %c1 = arith.constant 1 : index
    %c0_10 = arith.constant 0 : index
    %c0_11 = arith.constant 0 : index
    %13 = vector.load %arg2[%c1, %c0_10, %c0_11] : memref<3x4x8xf32, #tpu.memory_space<vmem>>, vector<1x4x8xf32>
    %14 = vector.shape_cast %13 : vector<1x4x8xf32> to vector<4x8xf32>
    %cst_12 = arith.constant dense<0.000000e+00> : vector<96x8xf32>
    %15 = tpu.matmul %12, %14, %cst_12 {dimension_numbers = #tpu.dot_dimension_numbers<[1], [0], [0], [1], [0, 0, 1, 1], [], []>} : vector<96x4xf32>, vector<4x8xf32>, vector<96x8xf32> -> vector<96x8xf32>
    %16 = arith.addf %11, %15 : vector<96x8xf32>
    %17 = vector.shape_cast %7 : vector<6x16x4xf32> to vector<96x4xf32>
    %c2 = arith.constant 2 : index
    %c0_13 = arith.constant 0 : index
    %c0_14 = arith.constant 0 : index
    %18 = vector.load %arg2[%c2, %c0_13, %c0_14] : memref<3x4x8xf32, #tpu.memory_space<vmem>>, vector<1x4x8xf32>
    %19 = vector.shape_cast %18 : vector<1x4x8xf32> to vector<4x8xf32>
    %cst_15 = arith.constant dense<0.000000e+00> : vector<96x8xf32>
    %20 = tpu.matmul %17, %19, %cst_15 {dimension_numbers = #tpu.dot_dimension_numbers<[1], [0], [0], [1], [0, 0, 1, 1], [], []>} : vector<96x4xf32>, vector<4x8xf32>, vector<96x8xf32> -> vector<96x8xf32>
    %21 = arith.addf %16, %20 : vector<96x8xf32>
    %22 = vector.broadcast %1 : vector<1x8xf32> to vector<96x8xf32>
    %23 = arith.addf %21, %22 : vector<96x8xf32>
    %cst_16 = arith.constant 0.000000e+00 : f32
    %24 = vector.broadcast %cst_16 : f32 to vector<96x8xf32>
    %25 = arith.maximumf %23, %24 : vector<96x8xf32>
    %26 = vector.shape_cast %25 : vector<96x8xf32> to vector<6x16x8xf32>
    %cst_17 = arith.constant 0.000000e+00 : f32
    %27 = vector.broadcast %cst_17 : f32 to vector<6x1x8xf32>
    %28 = vector.extract_strided_slice %26 {offsets = [0, 0, 0], sizes = [6, 15, 8], strides = [1, 1, 1]} : vector<6x16x8xf32> to vector<6x15x8xf32>
    %29 = tpu.concatenate %27, %28 in 1 : vector<6x1x8xf32>, vector<6x15x8xf32> -> vector<6x16x8xf32>
    %30 = vector.extract_strided_slice %26 {offsets = [0, 1, 0], sizes = [6, 15, 8], strides = [1, 1, 1]} : vector<6x16x8xf32> to vector<6x15x8xf32>
    %31 = tpu.concatenate %30, %27 in 1 : vector<6x15x8xf32>, vector<6x1x8xf32> -> vector<6x16x8xf32>
    %32 = vector.shape_cast %29 : vector<6x16x8xf32> to vector<96x8xf32>
    %c0_18 = arith.constant 0 : index
    %c0_19 = arith.constant 0 : index
    %c0_20 = arith.constant 0 : index
    %33 = vector.load %arg4[%c0_18, %c0_19, %c0_20] : memref<3x8x8xf32, #tpu.memory_space<vmem>>, vector<1x8x8xf32>
    %34 = vector.shape_cast %33 : vector<1x8x8xf32> to vector<8x8xf32>
    %cst_21 = arith.constant dense<0.000000e+00> : vector<96x8xf32>
    %35 = tpu.matmul %32, %34, %cst_21 {dimension_numbers = #tpu.dot_dimension_numbers<[1], [0], [0], [1], [0, 0, 1, 1], [], []>} : vector<96x8xf32>, vector<8x8xf32>, vector<96x8xf32> -> vector<96x8xf32>
    %36 = vector.shape_cast %26 : vector<6x16x8xf32> to vector<96x8xf32>
    %c1_22 = arith.constant 1 : index
    %c0_23 = arith.constant 0 : index
    %c0_24 = arith.constant 0 : index
    %37 = vector.load %arg4[%c1_22, %c0_23, %c0_24] : memref<3x8x8xf32, #tpu.memory_space<vmem>>, vector<1x8x8xf32>
    %38 = vector.shape_cast %37 : vector<1x8x8xf32> to vector<8x8xf32>
    %cst_25 = arith.constant dense<0.000000e+00> : vector<96x8xf32>
    %39 = tpu.matmul %36, %38, %cst_25 {dimension_numbers = #tpu.dot_dimension_numbers<[1], [0], [0], [1], [0, 0, 1, 1], [], []>} : vector<96x8xf32>, vector<8x8xf32>, vector<96x8xf32> -> vector<96x8xf32>
    %40 = arith.addf %35, %39 : vector<96x8xf32>
    %41 = vector.shape_cast %31 : vector<6x16x8xf32> to vector<96x8xf32>
    %c2_26 = arith.constant 2 : index
    %c0_27 = arith.constant 0 : index
    %c0_28 = arith.constant 0 : index
    %42 = vector.load %arg4[%c2_26, %c0_27, %c0_28] : memref<3x8x8xf32, #tpu.memory_space<vmem>>, vector<1x8x8xf32>
    %43 = vector.shape_cast %42 : vector<1x8x8xf32> to vector<8x8xf32>
    %cst_29 = arith.constant dense<0.000000e+00> : vector<96x8xf32>
    %44 = tpu.matmul %41, %43, %cst_29 {dimension_numbers = #tpu.dot_dimension_numbers<[1], [0], [0], [1], [0, 0, 1, 1], [], []>} : vector<96x8xf32>, vector<8x8xf32>, vector<96x8xf32> -> vector<96x8xf32>
    %45 = arith.addf %40, %44 : vector<96x8xf32>
    %46 = vector.broadcast %2 : vector<1x8xf32> to vector<96x8xf32>
    %47 = arith.addf %45, %46 : vector<96x8xf32>
    %cst_30 = arith.constant 0.000000e+00 : f32
    %48 = vector.broadcast %cst_30 : f32 to vector<96x8xf32>
    %49 = arith.maximumf %47, %48 : vector<96x8xf32>
    %50 = vector.shape_cast %49 : vector<96x8xf32> to vector<6x16x8xf32>
    %c0_31 = arith.constant 0 : index
    %c0_32 = arith.constant 0 : index
    %c0_33 = arith.constant 0 : index
    %51 = vector.load %arg6[%c0_31, %c0_32, %c0_33] : memref<6x16x8xf32, #tpu.memory_space<vmem>>, vector<6x16x8xf32>
    tpu.vector_store %arg6[%c0_31, %c0_32, %c0_33], %50 {strides = array<i32>} : memref<6x16x8xf32, #tpu.memory_space<vmem>>, vector<6x16x8xf32>,
    %c0_34 = arith.constant 0 : index
    %c0_35 = arith.constant 0 : index
    %c0_36 = arith.constant 0 : index
    %52 = tpu.strided_load %arg6[%c0_34, %c0_35, %c0_36] {strides = array<i32: 1, 2, 1>} : memref<6x16x8xf32, #tpu.memory_space<vmem>>, vector<6x8x8xf32>
    %c0_37 = arith.constant 0 : index
    %c1_38 = arith.constant 1 : index
    %c0_39 = arith.constant 0 : index
    %53 = tpu.strided_load %arg6[%c0_37, %c1_38, %c0_39] {strides = array<i32: 1, 2, 1>} : memref<6x16x8xf32, #tpu.memory_space<vmem>>, vector<6x8x8xf32>
    %54 = arith.maximumf %52, %53 : vector<6x8x8xf32>
    %c0_40 = arith.constant 0 : index
    %c0_41 = arith.constant 0 : index
    %c0_42 = arith.constant 0 : index
    %55 = vector.load %arg7[%c0_40, %c0_41, %c0_42] : memref<6x8x8xf32, #tpu.memory_space<vmem>>, vector<6x8x8xf32>
    tpu.vector_store %arg7[%c0_40, %c0_41, %c0_42], %54 {strides = array<i32>} : memref<6x8x8xf32, #tpu.memory_space<vmem>>, vector<6x8x8xf32>,
    return
  }
  func.func @transform_0(%arg0: i32) -> (i32, i32, i32) {
    %c0_i32 = arith.constant 0 : i32
    %c0_i32_0 = arith.constant 0 : i32
    %c0_i32_1 = arith.constant 0 : i32
    return %arg0, %c0_i32, %c0_i32_0 : i32, i32, i32
  }
  func.func @transform_1(%arg0: i32) -> (i32, i32, i32) {
    %c0_i32 = arith.constant 0 : i32
    %c0_i32_0 = arith.constant 0 : i32
    %c0_i32_1 = arith.constant 0 : i32
    %c0_i32_2 = arith.constant 0 : i32
    return %c0_i32, %c0_i32_0, %c0_i32_1 : i32, i32, i32
  }
  func.func @transform_2(%arg0: i32) -> (i32, i32) {
    %c0_i32 = arith.constant 0 : i32
    %c0_i32_0 = arith.constant 0 : i32
    %c0_i32_1 = arith.constant 0 : i32
    return %c0_i32, %c0_i32_0 : i32, i32
  }
  func.func @transform_3(%arg0: i32) -> (i32, i32, i32) {
    %c0_i32 = arith.constant 0 : i32
    %c0_i32_0 = arith.constant 0 : i32
    %c0_i32_1 = arith.constant 0 : i32
    %c0_i32_2 = arith.constant 0 : i32
    return %c0_i32, %c0_i32_0, %c0_i32_1 : i32, i32, i32
  }
  func.func @transform_4(%arg0: i32) -> (i32, i32) {
    %c0_i32 = arith.constant 0 : i32
    %c0_i32_0 = arith.constant 0 : i32
    %c0_i32_1 = arith.constant 0 : i32
    return %c0_i32, %c0_i32_0 : i32, i32
  }
  func.func @transform_5(%arg0: i32) -> (i32, i32, i32) {
    %c0_i32 = arith.constant 0 : i32
    %c0_i32_0 = arith.constant 0 : i32
    %c0_i32_1 = arith.constant 0 : i32
    return %arg0, %c0_i32, %c0_i32_0 : i32, i32, i32
  }
  func.func @transform_6(%arg0: i32) -> (i32, i32, i32) {
    %c0_i32 = arith.constant 0 : i32
    %c0_i32_0 = arith.constant 0 : i32
    %c0_i32_1 = arith.constant 0 : i32
    return %arg0, %c0_i32, %c0_i32_0 : i32, i32, i32
  }
}

</mosaic_0001>

<llo_original>
// kernel: downblock_forward.1
$region0: #{downblock_forward.1}
  #allocation0 [shape = 'u32[]', space=smem, size = 0x4, offset = 0x4, fixed_abs, tag = 'smem constant byte address 0x4 - core index']
  #allocation1 [shape = 'u32[72,128]{1,0:T(1,128)}', space=vmem, size = 0x9000, scoped, tag = 'internal scratch']
  %s0 = inlined_call_operand.vmem [shape: f32[6,16,4], index: 0, kind: input, shape index: {}]
  %s1 = inlined_call_operand.vmem [shape: f32[3,4,8], index: 1, kind: input, shape index: {}]
  %s2 = inlined_call_operand.vmem [shape: f32[1,8], index: 2, kind: input, shape index: {}]
  %s3 = inlined_call_operand.vmem [shape: f32[3,8,8], index: 3, kind: input, shape index: {}]
  %s4 = inlined_call_operand.vmem [shape: f32[1,8], index: 4, kind: input, shape index: {}]
  %s5 = inlined_call_operand.vmem [shape: f32[6,16,8], index: 5, kind: output, shape index: {0}]
  %s6 = inlined_call_operand.vmem [shape: f32[6,8,8], index: 6, kind: output, shape index: {1}]
  %7 = xla_tuple %s5, %s6
  %s8 = sld [smem:[#allocation0]]
  $region38: #{downblock_forward.1} parent=0
    _
  %s10 = ssub.s32 1, %s8
  %s11 = scalar_select 0, %s10, %s8
  // Predicated region
  $region2: #{downblock_forward.1} parent=0 // pred_check
    _
  $region3: #{downblock_forward.1} parent=0 // pred_check_branch
    %13 = sbr.rel (0) target = $region5
  $region4: #{downblock_forward.1} parent=0 // pred_region
    _
  $region5: #{downblock_forward.1} parent=0 // pred_fallthru
    _
  // Predicated region
  $region6: #{downblock_forward.1} parent=0 // pred_check
    _
  $region7: #{downblock_forward.1} parent=0 // pred_check_branch
    %15 = sbr.rel (0) target = $region9
  $region8: #{downblock_forward.1} parent=0 // pred_region
    _
  $region9: #{downblock_forward.1} parent=0 // pred_fallthru
    _
  // Predicated region
  $region10: #{downblock_forward.1} parent=0 // pred_check
    _
  $region11: #{downblock_forward.1} parent=0 // pred_check_branch
    %17 = sbr.rel (0) target = $region13
  $region12: #{downblock_forward.1} parent=0 // pred_region
    _
  $region13: #{downblock_forward.1} parent=0 // pred_fallthru
    _
  // Predicated region
  $region14: #{downblock_forward.1} parent=0 // pred_check
    _
  $region15: #{downblock_forward.1} parent=0 // pred_check_branch
    %19 = sbr.rel (0) target = $region17
  $region16: #{downblock_forward.1} parent=0 // pred_region
    _
  $region17: #{downblock_forward.1} parent=0 // pred_fallthru
    _
  // Predicated region
  $region18: #{downblock_forward.1} parent=0 // pred_check
    _
  $region19: #{downblock_forward.1} parent=0 // pred_check_branch
    %21 = sbr.rel (0) target = $region21
  $region20: #{downblock_forward.1} parent=0 // pred_region
    _
  $region21: #{downblock_forward.1} parent=0 // pred_fallthru
    _
  %v22 = vld [vmem:[%s0] sm:$0xff]
  %v23 = vld [vmem:[%s0 + $0x8] sm:$0xff]
  %v24 = vld [vmem:[%s0 + $0x10] sm:$0xff]
  %v25 = vld [vmem:[%s0 + $0x18] sm:$0xff]
  %v26 = vld [vmem:[%s0 + $0x20] sm:$0xff]
  %v27 = vld [vmem:[%s0 + $0x28] sm:$0xff]
  %v28 = vld [vmem:[%s0 + $0x30] sm:$0xff]
  %v29 = vld [vmem:[%s0 + $0x38] sm:$0xff]
  %v30 = vld [vmem:[%s0 + $0x40] sm:$0xff]
  %v31 = vld [vmem:[%s0 + $0x48] sm:$0xff]
  %v32 = vld [vmem:[%s0 + $0x50] sm:$0xff]
  %v33 = vld [vmem:[%s0 + $0x58] sm:$0xff]
  %v34 = vld [vmem:[%s2] sm:$0x1]
  %v35 = vld [vmem:[%s4] sm:$0x1]
  %vm48 = vcmask 1040384
  %v49 = vrot.slane %v22, 7
  %v50 = vrot.slane %v23, 7
  %v51 = vsel %vm48, %v49, %v50
  %v52 = vrot.slane %v24, 7
  %v53 = vrot.slane %v25, 7
  %v54 = vsel %vm48, %v52, %v53
  %v55 = vrot.slane %v26, 7
  %v56 = vrot.slane %v27, 7
  %v57 = vsel %vm48, %v55, %v56
  %v58 = vrot.slane %v28, 7
  %v59 = vrot.slane %v29, 7
  %v60 = vsel %vm48, %v58, %v59
  %v61 = vrot.slane %v30, 7
  %v62 = vrot.slane %v31, 7
  %v63 = vsel %vm48, %v61, %v62
  %v64 = vrot.slane %v32, 7
  %v65 = vrot.slane %v33, 7
  %v66 = vsel %vm48, %v64, %v65
  %v73 = vsel %vm48, 0.0, %v49
  %v74 = vsel %vm48, 0.0, %v52
  %v75 = vsel %vm48, 0.0, %v55
  %v76 = vsel %vm48, 0.0, %v58
  %v77 = vsel %vm48, 0.0, %v61
  %v78 = vsel %vm48, 0.0, %v64
  %vm79 = vcmask 1046528
  %v80 = vrot.slane %v22, 1
  %v81 = vrot.slane %v23, 1
  %v82 = vsel %vm79, %v80, %v81
  %v83 = vrot.slane %v24, 1
  %v84 = vrot.slane %v25, 1
  %v85 = vsel %vm79, %v83, %v84
  %v86 = vrot.slane %v26, 1
  %v87 = vrot.slane %v27, 1
  %v88 = vsel %vm79, %v86, %v87
  %v89 = vrot.slane %v28, 1
  %v90 = vrot.slane %v29, 1
  %v91 = vsel %vm79, %v89, %v90
  %v92 = vrot.slane %v30, 1
  %v93 = vrot.slane %v31, 1
  %v94 = vsel %vm79, %v92, %v93
  %v95 = vrot.slane %v32, 1
  %v96 = vrot.slane %v33, 1
  %v97 = vsel %vm79, %v95, %v96
  %v104 = vsel %vm79, %v81, 0.0
  %v105 = vsel %vm79, %v84, 0.0
  %v106 = vsel %vm79, %v87, 0.0
  %v107 = vsel %vm79, %v90, 0.0
  %v108 = vsel %vm79, %v93, 0.0
  %v109 = vsel %vm79, %v96, 0.0
  %v110 = vld [vmem:[%s1] sm:$0xf]
  %s111 = scalar_lea.vmem %s1, 4
  %v112 = vld [vmem:[%s111] sm:$0xf]
  %vm113 = vcmask 31744
  %v114 = vsel %vm113, %v22, 0
  %v116 = vsel %vm113, %v23, 0
  %v118 = vsel %vm113, %v24, 0
  %v120 = vsel %vm113, %v25, 0
  %v122 = vsel %vm113, %v26, 0
  %v124 = vsel %vm113, %v27, 0
  %v126 = vsel %vm113, %v28, 0
  %v128 = vsel %vm113, %v29, 0
  %v130 = vsel %vm113, %v30, 0
  %v132 = vsel %vm113, %v31, 0
  %v134 = vsel %vm113, %v32, 0
  %v136 = vsel %vm113, %v33, 0
  %vm138 = vcmask 1043456
  %v140 = vsel %vm138, %v112, 0
  %142 = vmatpush.msra.mxu0 0.0
  %143 = vmatpush.msra.mxu0 0.0
  %144 = vmatpush.msra.mxu0 0.0
  %145 = vmatpush.msra.mxu0 0.0
  %146 = vmatpush.msra.mxu0 0.0
  %147 = vmatpush.msra.mxu0 0.0
  %148 = vmatpush.msra.mxu0 0.0
  %149 = vmatpush.msra.mxu0 0.0
  %150 = vmatpush.msra.mxu0 0.0
  %151 = vmatpush.msra.mxu0 0.0
  %152 = vmatpush.msra.mxu0 0.0
  %153 = vmatpush.msra.mxu0 0.0
  %154 = vmatpush.msra.mxu0 0.0
  %155 = vmatpush.msra.mxu0 0.0
  %156 = vmatpush.msra.mxu0 0.0
  %157 = vmatpush.msra.mxu0 %v140
  %158 = vmatmul.f32.gmra.mxu0 %v114
  %v159 = vpop.f32.mrf.mxu0
  %v160 = vadd.f32 0.0, %v159
  %161 = vmatmul.f32.gmra.mxu0 %v116
  %v162 = vpop.f32.mrf.mxu0
  %v163 = vadd.f32 0.0, %v162
  %164 = vmatmul.f32.gmra.mxu0 %v118
  %v165 = vpop.f32.mrf.mxu0
  %v166 = vadd.f32 0.0, %v165
  %167 = vmatmul.f32.gmra.mxu0 %v120
  %v168 = vpop.f32.mrf.mxu0
  %v169 = vadd.f32 0.0, %v168
  %170 = vmatmul.f32.gmra.mxu0 %v122
  %v171 = vpop.f32.mrf.mxu0
  %v172 = vadd.f32 0.0, %v171
  %173 = vmatmul.f32.gmra.mxu0 %v124
  %v174 = vpop.f32.mrf.mxu0
  %v175 = vadd.f32 0.0, %v174
  %176 = vmatmul.f32.gmra.mxu0 %v126
  %v177 = vpop.f32.mrf.mxu0
  %v178 = vadd.f32 0.0, %v177
  %179 = vmatmul.f32.gmra.mxu0 %v128
  %v180 = vpop.f32.mrf.mxu0
  %v181 = vadd.f32 0.0, %v180
  %182 = vmatmul.f32.gmra.mxu0 %v130
  %v183 = vpop.f32.mrf.mxu0
  %v184 = vadd.f32 0.0, %v183
  %185 = vmatmul.f32.gmra.mxu0 %v132
  %v186 = vpop.f32.mrf.mxu0
  %v187 = vadd.f32 0.0, %v186
  %188 = vmatmul.f32.gmra.mxu0 %v134
  %v189 = vpop.f32.mrf.mxu0
  %v190 = vadd.f32 0.0, %v189
  %191 = vmatmul.f32.gmra.mxu0 %v136
  %v192 = vpop.f32.mrf.mxu0
  %v193 = vadd.f32 0.0, %v192
  %194 = vdwg.mxu0
  %v196 = vsel %vm113, %v73, 0
  %v198 = vsel %vm113, %v51, 0
  %v201 = vsel %vm113, %v74, 0
  %v203 = vsel %vm113, %v54, 0
  %v206 = vsel %vm113, %v75, 0
  %v208 = vsel %vm113, %v57, 0
  %v211 = vsel %vm113, %v76, 0
  %v213 = vsel %vm113, %v60, 0
  %v216 = vsel %vm113, %v77, 0
  %v218 = vsel %vm113, %v63, 0
  %v221 = vsel %vm113, %v78, 0
  %v223 = vsel %vm113, %v66, 0
  %v226 = vsel %vm138, %v110, 0
  %228 = vmatpush.msra.mxu0 0.0
  %229 = vmatpush.msra.mxu0 0.0
  %230 = vmatpush.msra.mxu0 0.0
  %231 = vmatpush.msra.mxu0 0.0
  %232 = vmatpush.msra.mxu0 0.0
  %233 = vmatpush.msra.mxu0 0.0
  %234 = vmatpush.msra.mxu0 0.0
  %235 = vmatpush.msra.mxu0 0.0
  %236 = vmatpush.msra.mxu0 0.0
  %237 = vmatpush.msra.mxu0 0.0
  %238 = vmatpush.msra.mxu0 0.0
  %239 = vmatpush.msra.mxu0 0.0
  %240 = vmatpush.msra.mxu0 0.0
  %241 = vmatpush.msra.mxu0 0.0
  %242 = vmatpush.msra.mxu0 0.0
  %243 = vmatpush.msra.mxu0 %v226
  %244 = vmatmul.f32.gmra.mxu0 %v196
  %v245 = vpop.f32.mrf.mxu0
  %v246 = vadd.f32 %v160, %v245
  %247 = vmatmul.f32.gmra.mxu0 %v198
  %v248 = vpop.f32.mrf.mxu0
  %v249 = vadd.f32 %v163, %v248
  %250 = vmatmul.f32.gmra.mxu0 %v201
  %v251 = vpop.f32.mrf.mxu0
  %v252 = vadd.f32 %v166, %v251
  %253 = vmatmul.f32.gmra.mxu0 %v203
  %v254 = vpop.f32.mrf.mxu0
  %v255 = vadd.f32 %v169, %v254
  %256 = vmatmul.f32.gmra.mxu0 %v206
  %v257 = vpop.f32.mrf.mxu0
  %v258 = vadd.f32 %v172, %v257
  %259 = vmatmul.f32.gmra.mxu0 %v208
  %v260 = vpop.f32.mrf.mxu0
  %v261 = vadd.f32 %v175, %v260
  %262 = vmatmul.f32.gmra.mxu0 %v211
  %v263 = vpop.f32.mrf.mxu0
  %v264 = vadd.f32 %v178, %v263
  %265 = vmatmul.f32.gmra.mxu0 %v213
  %v266 = vpop.f32.mrf.mxu0
  %v267 = vadd.f32 %v181, %v266
  %268 = vmatmul.f32.gmra.mxu0 %v216
  %v269 = vpop.f32.mrf.mxu0
  %v270 = vadd.f32 %v184, %v269
  %271 = vmatmul.f32.gmra.mxu0 %v218
  %v272 = vpop.f32.mrf.mxu0
  %v273 = vadd.f32 %v187, %v272
  %274 = vmatmul.f32.gmra.mxu0 %v221
  %v275 = vpop.f32.mrf.mxu0
  %v276 = vadd.f32 %v190, %v275
  %277 = vmatmul.f32.gmra.mxu0 %v223
  %v278 = vpop.f32.mrf.mxu0
  %v279 = vadd.f32 %v193, %v278
  %280 = vdwg.mxu0
  %s281 = scalar_lea.vmem %s1, 8
  %v282 = vld [vmem:[%s281] sm:$0xf]
  %v283 = vsel %vm113, %v82, 0
  %v286 = vsel %vm113, %v104, 0
  %v288 = vsel %vm113, %v85, 0
  %v291 = vsel %vm113, %v105, 0
  %v293 = vsel %vm113, %v88, 0
  %v296 = vsel %vm113, %v106, 0
  %v298 = vsel %vm113, %v91, 0
  %v301 = vsel %vm113, %v107, 0
  %v303 = vsel %vm113, %v94, 0
  %v306 = vsel %vm113, %v108, 0
  %v308 = vsel %vm113, %v97, 0
  %v311 = vsel %vm113, %v109, 0
  %v314 = vsel %vm138, %v282, 0
  %316 = vmatpush.msra.mxu0 0.0
  %317 = vmatpush.msra.mxu0 0.0
  %318 = vmatpush.msra.mxu0 0.0
  %319 = vmatpush.msra.mxu0 0.0
  %320 = vmatpush.msra.mxu0 0.0
  %321 = vmatpush.msra.mxu0 0.0
  %322 = vmatpush.msra.mxu0 0.0
  %323 = vmatpush.msra.mxu0 0.0
  %324 = vmatpush.msra.mxu0 0.0
  %325 = vmatpush.msra.mxu0 0.0
  %326 = vmatpush.msra.mxu0 0.0
  %327 = vmatpush.msra.mxu0 0.0
  %328 = vmatpush.msra.mxu0 0.0
  %329 = vmatpush.msra.mxu0 0.0
  %330 = vmatpush.msra.mxu0 0.0
  %331 = vmatpush.msra.mxu0 %v314
  %332 = vmatmul.f32.gmra.mxu0 %v283
  %v333 = vpop.f32.mrf.mxu0
  %v334 = vadd.f32 0.0, %v333
  %335 = vmatmul.f32.gmra.mxu0 %v286
  %v336 = vpop.f32.mrf.mxu0
  %v337 = vadd.f32 0.0, %v336
  %338 = vmatmul.f32.gmra.mxu0 %v288
  %v339 = vpop.f32.mrf.mxu0
  %v340 = vadd.f32 0.0, %v339
  %341 = vmatmul.f32.gmra.mxu0 %v291
  %v342 = vpop.f32.mrf.mxu0
  %v343 = vadd.f32 0.0, %v342
  %344 = vmatmul.f32.gmra.mxu0 %v293
  %v345 = vpop.f32.mrf.mxu0
  %v346 = vadd.f32 0.0, %v345
  %347 = vmatmul.f32.gmra.mxu0 %v296
  %v348 = vpop.f32.mrf.mxu0
  %v349 = vadd.f32 0.0, %v348
  %350 = vmatmul.f32.gmra.mxu0 %v298
  %v351 = vpop.f32.mrf.mxu0
  %v352 = vadd.f32 0.0, %v351
  %353 = vmatmul.f32.gmra.mxu0 %v301
  %v354 = vpop.f32.mrf.mxu0
  %v355 = vadd.f32 0.0, %v354
  %356 = vmatmul.f32.gmra.mxu0 %v303
  %v357 = vpop.f32.mrf.mxu0
  %v358 = vadd.f32 0.0, %v357
  %359 = vmatmul.f32.gmra.mxu0 %v306
  %v360 = vpop.f32.mrf.mxu0
  %v361 = vadd.f32 0.0, %v360
  %362 = vmatmul.f32.gmra.mxu0 %v308
  %v363 = vpop.f32.mrf.mxu0
  %v364 = vadd.f32 0.0, %v363
  %365 = vmatmul.f32.gmra.mxu0 %v311
  %v366 = vpop.f32.mrf.mxu0
  %v367 = vadd.f32 0.0, %v366
  %368 = vdwg.mxu0
  %v369 = vadd.f32 %v246, %v334
  %v370 = vadd.f32 %v249, %v337
  %v371 = vadd.f32 %v252, %v340
  %v372 = vadd.f32 %v255, %v343
  %v373 = vadd.f32 %v258, %v346
  %v374 = vadd.f32 %v261, %v349
  %v375 = vadd.f32 %v264, %v352
  %v376 = vadd.f32 %v267, %v355
  %v377 = vadd.f32 %v270, %v358
  %v378 = vadd.f32 %v273, %v361
  %v379 = vadd.f32 %v276, %v364
  %v380 = vadd.f32 %v279, %v367
  %v382 = vperm.slane %v34, 0
  %v384 = vadd.f32 %v369, %v382
  %v385 = vadd.f32 %v370, %v382
  %v386 = vadd.f32 %v371, %v382
  %v387 = vadd.f32 %v372, %v382
  %v388 = vadd.f32 %v373, %v382
  %v389 = vadd.f32 %v374, %v382
  %v390 = vadd.f32 %v375, %v382
  %v391 = vadd.f32 %v376, %v382
  %v392 = vadd.f32 %v377, %v382
  %v393 = vadd.f32 %v378, %v382
  %v394 = vadd.f32 %v379, %v382
  %v395 = vadd.f32 %v380, %v382
  %v396 = vmax.f32 %v384, 0.0
  %v397 = vmax.f32 %v385, 0.0
  %v398 = vmax.f32 %v386, 0.0
  %v399 = vmax.f32 %v387, 0.0
  %v400 = vmax.f32 %v388, 0.0
  %v401 = vmax.f32 %v389, 0.0
  %v402 = vmax.f32 %v390, 0.0
  %v403 = vmax.f32 %v391, 0.0
  %v404 = vmax.f32 %v392, 0.0
  %v405 = vmax.f32 %v393, 0.0
  %v406 = vmax.f32 %v394, 0.0
  %v407 = vmax.f32 %v395, 0.0
  %v420 = vrot.slane %v396, 7
  %v421 = vrot.slane %v397, 7
  %v422 = vsel %vm48, %v420, %v421
  %v423 = vrot.slane %v398, 7
  %v424 = vrot.slane %v399, 7
  %v425 = vsel %vm48, %v423, %v424
  %v426 = vrot.slane %v400, 7
  %v427 = vrot.slane %v401, 7
  %v428 = vsel %vm48, %v426, %v427
  %v429 = vrot.slane %v402, 7
  %v430 = vrot.slane %v403, 7
  %v431 = vsel %vm48, %v429, %v430
  %v432 = vrot.slane %v404, 7
  %v433 = vrot.slane %v405, 7
  %v434 = vsel %vm48, %v432, %v433
  %v435 = vrot.slane %v406, 7
  %v436 = vrot.slane %v407, 7
  %v437 = vsel %vm48, %v435, %v436
  %v444 = vsel %vm48, 0.0, %v420
  %v445 = vsel %vm48, 0.0, %v423
  %v446 = vsel %vm48, 0.0, %v426
  %v447 = vsel %vm48, 0.0, %v429
  %v448 = vsel %vm48, 0.0, %v432
  %v449 = vsel %vm48, 0.0, %v435
  %v450 = vrot.slane %v396, 1
  %v451 = vrot.slane %v397, 1
  %v452 = vsel %vm79, %v450, %v451
  %v453 = vrot.slane %v398, 1
  %v454 = vrot.slane %v399, 1
  %v455 = vsel %vm79, %v453, %v454
  %v456 = vrot.slane %v400, 1
  %v457 = vrot.slane %v401, 1
  %v458 = vsel %vm79, %v456, %v457
  %v459 = vrot.slane %v402, 1
  %v460 = vrot.slane %v403, 1
  %v461 = vsel %vm79, %v459, %v460
  %v462 = vrot.slane %v404, 1
  %v463 = vrot.slane %v405, 1
  %v464 = vsel %vm79, %v462, %v463
  %v465 = vrot.slane %v406, 1
  %v466 = vrot.slane %v407, 1
  %v467 = vsel %vm79, %v465, %v466
  %v474 = vsel %vm79, %v451, 0.0
  %v475 = vsel %vm79, %v454, 0.0
  %v476 = vsel %vm79, %v457, 0.0
  %v477 = vsel %vm79, %v460, 0.0
  %v478 = vsel %vm79, %v463, 0.0
  %v479 = vsel %vm79, %v466, 0.0
  %v480 = vld [vmem:[%s3] sm:$0xff]
  %s481 = scalar_lea.vmem %s3, 8
  %v482 = vld [vmem:[%s481] sm:$0xff]
  %vm483 = vcmask 64512
  %v484 = vsel %vm483, %v396, 0
  %v486 = vsel %vm483, %v397, 0
  %v488 = vsel %vm483, %v398, 0
  %v490 = vsel %vm483, %v399, 0
  %v492 = vsel %vm483, %v400, 0
  %v494 = vsel %vm483, %v401, 0
  %v496 = vsel %vm483, %v402, 0
  %v498 = vsel %vm483, %v403, 0
  %v500 = vsel %vm483, %v404, 0
  %v502 = vsel %vm483, %v405, 0
  %v504 = vsel %vm483, %v406, 0
  %v506 = vsel %vm483, %v407, 0
  %508 = vmatpush.msra.mxu0 0.0
  %509 = vmatpush.msra.mxu0 0.0
  %510 = vmatpush.msra.mxu0 0.0
  %511 = vmatpush.msra.mxu0 0.0
  %512 = vmatpush.msra.mxu0 0.0
  %513 = vmatpush.msra.mxu0 0.0
  %514 = vmatpush.msra.mxu0 0.0
  %515 = vmatpush.msra.mxu0 0.0
  %516 = vmatpush.msra.mxu0 0.0
  %517 = vmatpush.msra.mxu0 0.0
  %518 = vmatpush.msra.mxu0 0.0
  %519 = vmatpush.msra.mxu0 0.0
  %520 = vmatpush.msra.mxu0 0.0
  %521 = vmatpush.msra.mxu0 0.0
  %522 = vmatpush.msra.mxu0 0.0
  %523 = vmatpush.msra.mxu0 %v482
  %524 = vmatmul.f32.gmra.mxu0 %v484
  %v525 = vpop.f32.mrf.mxu0
  %v526 = vadd.f32 0.0, %v525
  %527 = vmatmul.f32.gmra.mxu0 %v486
  %v528 = vpop.f32.mrf.mxu0
  %v529 = vadd.f32 0.0, %v528
  %530 = vmatmul.f32.gmra.mxu0 %v488
  %v531 = vpop.f32.mrf.mxu0
  %v532 = vadd.f32 0.0, %v531
  %533 = vmatmul.f32.gmra.mxu0 %v490
  %v534 = vpop.f32.mrf.mxu0
  %v535 = vadd.f32 0.0, %v534
  %536 = vmatmul.f32.gmra.mxu0 %v492
  %v537 = vpop.f32.mrf.mxu0
  %v538 = vadd.f32 0.0, %v537
  %539 = vmatmul.f32.gmra.mxu0 %v494
  %v540 = vpop.f32.mrf.mxu0
  %v541 = vadd.f32 0.0, %v540
  %542 = vmatmul.f32.gmra.mxu0 %v496
  %v543 = vpop.f32.mrf.mxu0
  %v544 = vadd.f32 0.0, %v543
  %545 = vmatmul.f32.gmra.mxu0 %v498
  %v546 = vpop.f32.mrf.mxu0
  %v547 = vadd.f32 0.0, %v546
  %548 = vmatmul.f32.gmra.mxu0 %v500
  %v549 = vpop.f32.mrf.mxu0
  %v550 = vadd.f32 0.0, %v549
  %551 = vmatmul.f32.gmra.mxu0 %v502
  %v552 = vpop.f32.mrf.mxu0
  %v553 = vadd.f32 0.0, %v552
  %554 = vmatmul.f32.gmra.mxu0 %v504
  %v555 = vpop.f32.mrf.mxu0
  %v556 = vadd.f32 0.0, %v555
  %557 = vmatmul.f32.gmra.mxu0 %v506
  %v558 = vpop.f32.mrf.mxu0
  %v559 = vadd.f32 0.0, %v558
  %560 = vdwg.mxu0
  %v562 = vsel %vm483, %v444, 0
  %v564 = vsel %vm483, %v422, 0
  %v567 = vsel %vm483, %v445, 0
  %v569 = vsel %vm483, %v425, 0
  %v572 = vsel %vm483, %v446, 0
  %v574 = vsel %vm483, %v428, 0
  %v577 = vsel %vm483, %v447, 0
  %v579 = vsel %vm483, %v431, 0
  %v582 = vsel %vm483, %v448, 0
  %v584 = vsel %vm483, %v434, 0
  %v587 = vsel %vm483, %v449, 0
  %v589 = vsel %vm483, %v437, 0
  %591 = vmatpush.msra.mxu0 0.0
  %592 = vmatpush.msra.mxu0 0.0
  %593 = vmatpush.msra.mxu0 0.0
  %594 = vmatpush.msra.mxu0 0.0
  %595 = vmatpush.msra.mxu0 0.0
  %596 = vmatpush.msra.mxu0 0.0
  %597 = vmatpush.msra.mxu0 0.0
  %598 = vmatpush.msra.mxu0 0.0
  %599 = vmatpush.msra.mxu0 0.0
  %600 = vmatpush.msra.mxu0 0.0
  %601 = vmatpush.msra.mxu0 0.0
  %602 = vmatpush.msra.mxu0 0.0
  %603 = vmatpush.msra.mxu0 0.0
  %604 = vmatpush.msra.mxu0 0.0
  %605 = vmatpush.msra.mxu0 0.0
  %606 = vmatpush.msra.mxu0 %v480
  %607 = vmatmul.f32.gmra.mxu0 %v562
  %v608 = vpop.f32.mrf.mxu0
  %v609 = vadd.f32 %v526, %v608
  %610 = vmatmul.f32.gmra.mxu0 %v564
  %v611 = vpop.f32.mrf.mxu0
  %v612 = vadd.f32 %v529, %v611
  %613 = vmatmul.f32.gmra.mxu0 %v567
  %v614 = vpop.f32.mrf.mxu0
  %v615 = vadd.f32 %v532, %v614
  %616 = vmatmul.f32.gmra.mxu0 %v569
  %v617 = vpop.f32.mrf.mxu0
  %v618 = vadd.f32 %v535, %v617
  %619 = vmatmul.f32.gmra.mxu0 %v572
  %v620 = vpop.f32.mrf.mxu0
  %v621 = vadd.f32 %v538, %v620
  %622 = vmatmul.f32.gmra.mxu0 %v574
  %v623 = vpop.f32.mrf.mxu0
  %v624 = vadd.f32 %v541, %v623
  %625 = vmatmul.f32.gmra.mxu0 %v577
  %v626 = vpop.f32.mrf.mxu0
  %v627 = vadd.f32 %v544, %v626
  %628 = vmatmul.f32.gmra.mxu0 %v579
  %v629 = vpop.f32.mrf.mxu0
  %v630 = vadd.f32 %v547, %v629
  %631 = vmatmul.f32.gmra.mxu0 %v582
  %v632 = vpop.f32.mrf.mxu0
  %v633 = vadd.f32 %v550, %v632
  %634 = vmatmul.f32.gmra.mxu0 %v584
  %v635 = vpop.f32.mrf.mxu0
  %v636 = vadd.f32 %v553, %v635
  %637 = vmatmul.f32.gmra.mxu0 %v587
  %v638 = vpop.f32.mrf.mxu0
  %v639 = vadd.f32 %v556, %v638
  %640 = vmatmul.f32.gmra.mxu0 %v589
  %v641 = vpop.f32.mrf.mxu0
  %v642 = vadd.f32 %v559, %v641
  %643 = vdwg.mxu0
  %s644 = scalar_lea.vmem %s3, 16
  %v645 = vld [vmem:[%s644] sm:$0xff]
  %v646 = vsel %vm483, %v452, 0
  %v649 = vsel %vm483, %v474, 0
  %v651 = vsel %vm483, %v455, 0
  %v654 = vsel %vm483, %v475, 0
  %v656 = vsel %vm483, %v458, 0
  %v659 = vsel %vm483, %v476, 0
  %v661 = vsel %vm483, %v461, 0
  %v664 = vsel %vm483, %v477, 0
  %v666 = vsel %vm483, %v464, 0
  %v669 = vsel %vm483, %v478, 0
  %v671 = vsel %vm483, %v467, 0
  %v674 = vsel %vm483, %v479, 0
  %676 = vmatpush.msra.mxu0 0.0
  %677 = vmatpush.msra.mxu0 0.0
  %678 = vmatpush.msra.mxu0 0.0
  %679 = vmatpush.msra.mxu0 0.0
  %680 = vmatpush.msra.mxu0 0.0
  %681 = vmatpush.msra.mxu0 0.0
  %682 = vmatpush.msra.mxu0 0.0
  %683 = vmatpush.msra.mxu0 0.0
  %684 = vmatpush.msra.mxu0 0.0
  %685 = vmatpush.msra.mxu0 0.0
  %686 = vmatpush.msra.mxu0 0.0
  %687 = vmatpush.msra.mxu0 0.0
  %688 = vmatpush.msra.mxu0 0.0
  %689 = vmatpush.msra.mxu0 0.0
  %690 = vmatpush.msra.mxu0 0.0
  %691 = vmatpush.msra.mxu0 %v645
  %692 = vmatmul.f32.gmra.mxu0 %v646
  %v693 = vpop.f32.mrf.mxu0
  %v694 = vadd.f32 0.0, %v693
  %695 = vmatmul.f32.gmra.mxu0 %v649
  %v696 = vpop.f32.mrf.mxu0
  %v697 = vadd.f32 0.0, %v696
  %698 = vmatmul.f32.gmra.mxu0 %v651
  %v699 = vpop.f32.mrf.mxu0
  %v700 = vadd.f32 0.0, %v699
  %701 = vmatmul.f32.gmra.mxu0 %v654
  %v702 = vpop.f32.mrf.mxu0
  %v703 = vadd.f32 0.0, %v702
  %704 = vmatmul.f32.gmra.mxu0 %v656
  %v705 = vpop.f32.mrf.mxu0
  %v706 = vadd.f32 0.0, %v705
  %707 = vmatmul.f32.gmra.mxu0 %v659
  %v708 = vpop.f32.mrf.mxu0
  %v709 = vadd.f32 0.0, %v708
  %710 = vmatmul.f32.gmra.mxu0 %v661
  %v711 = vpop.f32.mrf.mxu0
  %v712 = vadd.f32 0.0, %v711
  %713 = vmatmul.f32.gmra.mxu0 %v664
  %v714 = vpop.f32.mrf.mxu0
  %v715 = vadd.f32 0.0, %v714
  %716 = vmatmul.f32.gmra.mxu0 %v666
  %v717 = vpop.f32.mrf.mxu0
  %v718 = vadd.f32 0.0, %v717
  %719 = vmatmul.f32.gmra.mxu0 %v669
  %v720 = vpop.f32.mrf.mxu0
  %v721 = vadd.f32 0.0, %v720
  %722 = vmatmul.f32.gmra.mxu0 %v671
  %v723 = vpop.f32.mrf.mxu0
  %v724 = vadd.f32 0.0, %v723
  %725 = vmatmul.f32.gmra.mxu0 %v674
  %v726 = vpop.f32.mrf.mxu0
  %v727 = vadd.f32 0.0, %v726
  %728 = vdwg.mxu0
  %v729 = vadd.f32 %v609, %v694
  %v730 = vadd.f32 %v612, %v697
  %v731 = vadd.f32 %v615, %v700
  %v732 = vadd.f32 %v618, %v703
  %v733 = vadd.f32 %v621, %v706
  %v734 = vadd.f32 %v624, %v709
  %v735 = vadd.f32 %v627, %v712
  %v736 = vadd.f32 %v630, %v715
  %v737 = vadd.f32 %v633, %v718
  %v738 = vadd.f32 %v636, %v721
  %v739 = vadd.f32 %v639, %v724
  %v740 = vadd.f32 %v642, %v727
  %v742 = vperm.slane %v35, 0
  %v744 = vadd.f32 %v729, %v742
  %v745 = vadd.f32 %v730, %v742
  %v746 = vadd.f32 %v731, %v742
  %v747 = vadd.f32 %v732, %v742
  %v748 = vadd.f32 %v733, %v742
  %v749 = vadd.f32 %v734, %v742
  %v750 = vadd.f32 %v735, %v742
  %v751 = vadd.f32 %v736, %v742
  %v752 = vadd.f32 %v737, %v742
  %v753 = vadd.f32 %v738, %v742
  %v754 = vadd.f32 %v739, %v742
  %v755 = vadd.f32 %v740, %v742
  %v756 = vmax.f32 %v744, 0.0
  %v757 = vmax.f32 %v745, 0.0
  %v758 = vmax.f32 %v746, 0.0
  %v759 = vmax.f32 %v747, 0.0
  %v760 = vmax.f32 %v748, 0.0
  %v761 = vmax.f32 %v749, 0.0
  %v762 = vmax.f32 %v750, 0.0
  %v763 = vmax.f32 %v751, 0.0
  %v764 = vmax.f32 %v752, 0.0
  %v765 = vmax.f32 %v753, 0.0
  %v766 = vmax.f32 %v754, 0.0
  %v767 = vmax.f32 %v755, 0.0
  %768 = vst.msk [vmem:[%s5] sm:$0xff] %vm483, %v756
  %769 = vst.msk [vmem:[%s5 + $0x8] sm:$0xff] %vm483, %v757
  %770 = vst.msk [vmem:[%s5 + $0x10] sm:$0xff] %vm483, %v758
  %771 = vst.msk [vmem:[%s5 + $0x18] sm:$0xff] %vm483, %v759
  %772 = vst.msk [vmem:[%s5 + $0x20] sm:$0xff] %vm483, %v760
  %773 = vst.msk [vmem:[%s5 + $0x28] sm:$0xff] %vm483, %v761
  %774 = vst.msk [vmem:[%s5 + $0x30] sm:$0xff] %vm483, %v762
  %775 = vst.msk [vmem:[%s5 + $0x38] sm:$0xff] %vm483, %v763
  %776 = vst.msk [vmem:[%s5 + $0x40] sm:$0xff] %vm483, %v764
  %777 = vst.msk [vmem:[%s5 + $0x48] sm:$0xff] %vm483, %v765
  %778 = vst.msk [vmem:[%s5 + $0x50] sm:$0xff] %vm483, %v766
  %779 = vst.msk [vmem:[%s5 + $0x58] sm:$0xff] %vm483, %v767
  %v780 = vld [vmem:[%s5] ss:$2 sm:$0xff]
  %s781 = scalar_lea.vmem %s5, 16
  %v782 = vld [vmem:[%s781] ss:$2 sm:$0xff]
  %s783 = scalar_lea.vmem %s5, 32
  %v784 = vld [vmem:[%s783] ss:$2 sm:$0xff]
  %s785 = scalar_lea.vmem %s5, 48
  %v786 = vld [vmem:[%s785] ss:$2 sm:$0xff]
  %s787 = scalar_lea.vmem %s5, 64
  %v788 = vld [vmem:[%s787] ss:$2 sm:$0xff]
  %s789 = scalar_lea.vmem %s5, 80
  %v790 = vld [vmem:[%s789] ss:$2 sm:$0xff]
  %s791 = scalar_lea.vmem %s5, 1
  %v792 = vld [vmem:[%s791] ss:$2 sm:$0xff]
  %s793 = scalar_lea.vmem %s5, 17
  %v794 = vld [vmem:[%s793] ss:$2 sm:$0xff]
  %s795 = scalar_lea.vmem %s5, 33
  %v796 = vld [vmem:[%s795] ss:$2 sm:$0xff]
  %s797 = scalar_lea.vmem %s5, 49
  %v798 = vld [vmem:[%s797] ss:$2 sm:$0xff]
  %s799 = scalar_lea.vmem %s5, 65
  %v800 = vld [vmem:[%s799] ss:$2 sm:$0xff]
  %s801 = scalar_lea.vmem %s5, 81
  %v802 = vld [vmem:[%s801] ss:$2 sm:$0xff]
  %v803 = vmax.f32 %v780, %v792
  %v804 = vmax.f32 %v782, %v794
  %v805 = vmax.f32 %v784, %v796
  %v806 = vmax.f32 %v786, %v798
  %v807 = vmax.f32 %v788, %v800
  %v808 = vmax.f32 %v790, %v802
  %809 = vst.msk [vmem:[%s6] sm:$0xff] %vm483, %v803
  %810 = vst.msk [vmem:[%s6 + $0x8] sm:$0xff] %vm483, %v804
  %811 = vst.msk [vmem:[%s6 + $0x10] sm:$0xff] %vm483, %v805
  %812 = vst.msk [vmem:[%s6 + $0x18] sm:$0xff] %vm483, %v806
  %813 = vst.msk [vmem:[%s6 + $0x20] sm:$0xff] %vm483, %v807
  %814 = vst.msk [vmem:[%s6 + $0x28] sm:$0xff] %vm483, %v808
  // Predicated region
  $region22: #{downblock_forward.1} parent=0 // pred_check
    _
  $region23: #{downblock_forward.1} parent=0 // pred_check_branch
    %816 = sbr.rel (0) target = $region25
  $region24: #{downblock_forward.1} parent=0 // pred_region
    _
  $region25: #{downblock_forward.1} parent=0 // pred_fallthru
    _
  // Predicated region
  $region26: #{downblock_forward.1} parent=0 // pred_check
    _
  $region27: #{downblock_forward.1} parent=0 // pred_check_branch
    %818 = sbr.rel (0) target = $region29
  $region28: #{downblock_forward.1} parent=0 // pred_region
    _
  $region29: #{downblock_forward.1} parent=0 // pred_fallthru
    _
  // Predicated region
  $region30: #{downblock_forward.1} parent=0 // pred_check
    _
  $region31: #{downblock_forward.1} parent=0 // pred_check_branch
    %820 = sbr.rel (0) target = $region33
  $region32: #{downblock_forward.1} parent=0 // pred_region
    _
  $region33: #{downblock_forward.1} parent=0 // pred_fallthru
    _
  // Predicated region
  $region34: #{downblock_forward.1} parent=0 // pred_check
    _
  $region35: #{downblock_forward.1} parent=0 // pred_check_branch
    %822 = sbr.rel (0) target = $region37
  $region36: #{downblock_forward.1} parent=0 // pred_region
    _
  $region37: #{downblock_forward.1} parent=0 // pred_fallthru
    _

</llo_original>
